<compile_context>
chip_gen: v7x
topology: tpu7x:2x2x1
jax: 0.10.0
libtpu: 0.0.40
codegen_flags: <defaults>
</compile_context>

<pallas_src>
import jax
import jax.numpy as jnp
from jax import lax
from jax.experimental import pallas as pl
from jax.experimental.pallas import tpu as pltpu

PAD = 2    # matches nn.Conv2d(..., padding=2)
KSIZE = 5  # residual add only works when ksize == 5 with padding == 2


def _resblock_kernel(pmat_ref, x_ref, w1_ref, b1_ref, w2_ref, b2_ref, out_ref):
    # pmat_ref: (K*K*Cin, R)   im2col patches (pixels on lanes)
    # x_ref:    (Cin, R)       residual input
    # w1_ref:   (Cin, K*K*Cin) conv1 weight, output-channel major
    # b1_ref:   (Cin, 1)       f32
    # w2_ref:   (Cout, Cin)    1x1 conv weight
    # b2_ref:   (Cout, 1)      f32
    # out_ref:  (Cout, R)
    acc = jnp.dot(w1_ref[...], pmat_ref[...],
                  preferred_element_type=jnp.float32)            # conv1 -> (Cin, R)
    acc = acc + b1_ref[...]                                      # bias (f32)
    y = x_ref[...].astype(jnp.float32) + jnp.maximum(acc, 0.0)   # x + relu(conv1(x))
    out = jnp.dot(w2_ref[...], y.astype(w2_ref.dtype),
                  preferred_element_type=jnp.float32)            # 1x1 conv -> (Cout, R)
    out = out + b2_ref[...]
    out_ref[...] = out.astype(out_ref.dtype)


def _pick_block_n(n, r_img, kkc, cin, cout, itemsize, vmem_budget_bytes=8 << 20):
    """Largest per-step image count that (a) fits the VMEM budget including 2x
    double-buffering, (b) divides N, (c) keeps >=2 grid steps when N>=2 so both
    v7x TensorCores get work, and (d) keeps the lane block a multiple of 128."""
    per_image = (kkc + cin + cout) * r_img * itemsize * 2
    bn = max(1, int(vmem_budget_bytes // max(per_image, 1)))
    bn = min(bn, n)
    if n >= 2:
        bn = min(bn, n // 2)
    while bn > 1 and n % bn:
        bn -= 1
    bn = max(bn, 1)
    if (bn * r_img) % 128 != 0:   # lane dim must be 128-divisible unless full extent
        bn = n
    return bn


def resblock_forward(x_nchw, w1_oihw, b1, w2_oihw, b2, *, compute_dtype=None,
                     block_n=None):
    """x_nchw: (N, Cin, H, W). Returns (N, Cout, H, W). Matches the PyTorch module."""
    N, Cin, H, W = x_nchw.shape
    O1, I1, K, K2 = w1_oihw.shape
    Cout, I2, k1, k2 = w2_oihw.shape
    assert K == K2 == KSIZE, "residual add requires ksize == 5 with padding == 2"
    assert O1 == I1 == Cin, "conv1 must map Cin -> Cin for the residual add"
    assert I2 == Cin and (k1, k2) == (1, 1), "conv2 must be a 1x1 conv over Cin"

    dt = jnp.dtype(compute_dtype) if compute_dtype is not None else x_nchw.dtype
    r_img = H * W
    kkc = K * K * Cin

    # ---- wrapper-side data prep (pure JAX; fused by XLA under jit) ----------
    # im2col patches, transposed so pixels live on the 128-lane axis:
    #   pmat[(kh*K + kw)*Cin + c, n*H*W + h*W + w] = x_pad[n, c, kh+h, kw+w]
    x_pad = jnp.pad(x_nchw, ((0, 0), (0, 0), (PAD, PAD), (PAD, PAD)))
    taps = [x_pad[:, :, kh:kh + H, kw:kw + W]            # each (N, Cin, H, W)
            for kh in range(K) for kw in range(K)]
    pmat = jnp.stack(taps, axis=0)                       # (K*K, N, Cin, H, W)
    pmat = pmat.transpose(0, 2, 1, 3, 4).reshape(kkc, N * r_img).astype(dt)

    # residual / weights / biases in the same channels-on-sublanes layout
    x_res = jnp.transpose(x_nchw, (1, 0, 2, 3)).reshape(Cin, N * r_img).astype(dt)
    # (O, I, kh, kw) -> (O, kh, kw, I) -> (O, K*K*Cin); col index = (kh*K+kw)*Cin + c
    w1_t = jnp.transpose(w1_oihw, (0, 2, 3, 1)).reshape(Cin, kkc).astype(dt)
    w2_t = w2_oihw[:, :, 0, 0].astype(dt)                # (Cout, Cin)
    b1_c = b1.reshape(Cin, 1).astype(jnp.float32)        # elementwise stays f32 (v5e)
    b2_c = b2.reshape(Cout, 1).astype(jnp.float32)

    if block_n is None:
        block_n = _pick_block_n(N, r_img, kkc, Cin, Cout, jnp.dtype(dt).itemsize)
    assert N % block_n == 0
    r_blk = block_n * r_img
    grid = (N // block_n,)

    out_t = pl.pallas_call(
        _resblock_kernel,
        out_shape=jax.ShapeDtypeStruct((Cout, N * r_img), x_nchw.dtype),
        grid_spec=pltpu.PrefetchScalarGridSpec(
            num_scalar_prefetch=0,
            grid=grid,
            in_specs=[
                pl.BlockSpec((kkc, r_blk), lambda i: (0, i)),   # im2col patches
                pl.BlockSpec((Cin, r_blk), lambda i: (0, i)),   # residual input
                pl.BlockSpec((Cin, kkc), lambda i: (0, 0)),     # w1
                pl.BlockSpec((Cin, 1), lambda i: (0, 0)),       # b1
                pl.BlockSpec((Cout, Cin), lambda i: (0, 0)),    # w2
                pl.BlockSpec((Cout, 1), lambda i: (0, 0)),      # b2
            ],
            out_specs=pl.BlockSpec((Cout, r_blk), lambda i: (0, i)),
        ),
        compiler_params=pltpu.CompilerParams(
            dimension_semantics=("parallel",),
            vmem_limit_bytes=32 * 1024 * 1024,
        ),
    )(pmat, x_res, w1_t, b1_c, w2_t, b2_c)

    # (Cout, N*H*W) -> (N, Cout, H, W)
    return jnp.transpose(out_t.reshape(Cout, N, H, W), (1, 0, 2, 3))


def _reference(x_nchw, w1_oihw, b1, w2_oihw, b2):
    """Pure-JAX reference matching F.conv2d semantics (NCHW / OIHW)."""
    dn = lax.conv_dimension_numbers(x_nchw.shape, w1_oihw.shape, ("NCHW", "OIHW", "NCHW"))
    c1 = lax.conv_general_dilated(x_nchw, w1_oihw, (1, 1), ((PAD, PAD), (PAD, PAD)),
                                  dimension_numbers=dn) + b1[None, :, None, None]
    y = x_nchw + jnp.maximum(c1, 0.0)
    dn2 = lax.conv_dimension_numbers(y.shape, w2_oihw.shape, ("NCHW", "OIHW", "NCHW"))
    c2 = lax.conv_general_dilated(y, w2_oihw, (1, 1), ((0, 0), (0, 0)),
                                  dimension_numbers=dn2) + b2[None, :, None, None]
    return c2


if __name__ == "__main__":
    # Small shapes consistent with the module: ksize=5 (padding=2 preserves spatial size)
    N, Cin, Cout, H, W, K = 2, 4, 8, 16, 16, 5

    key = jax.random.PRNGKey(0)
    kx, kw1, kb1, kw2, kb2 = jax.random.split(key, 5)

    x = jax.random.normal(kx, (N, Cin, H, W), jnp.float32)
    # PyTorch-shaped params: OIHW weights, (O,) biases
    w1 = jax.random.normal(kw1, (Cin, Cin, K, K), jnp.float32) * 0.1
    b1 = jax.random.normal(kb1, (Cin,), jnp.float32) * 0.1
    w2 = jax.random.normal(kw2, (Cout, Cin, 1, 1), jnp.float32) * 0.1
    b2 = jax.random.normal(kb2, (Cout,), jnp.float32) * 0.1

    fwd = jax.jit(resblock_forward)
    out = jax.block_until_ready(fwd(x, w1, b1, w2, b2))
    ref = jax.block_until_ready(_reference(x, w1, b1, w2, b2))

    assert out.shape == (N, Cout, H, W)
    assert jnp.allclose(out, ref, atol=1e-4, rtol=1e-4), "mismatch vs reference"

    print("KERNEL_OK")
</pallas_src>

<mosaic_0001>
module attributes {stable_mosaic.version = 11 : i64} {
  func.func @_resblock_kernel(%arg0: i32, %arg1: memref<100x256xf32, #tpu.memory_space<vmem>>, %arg2: memref<4x256xf32, #tpu.memory_space<vmem>>, %arg3: memref<4x100xf32, #tpu.memory_space<vmem>>, %arg4: memref<4x1xf32, #tpu.memory_space<vmem>>, %arg5: memref<8x4xf32, #tpu.memory_space<vmem>>, %arg6: memref<8x1xf32, #tpu.memory_space<vmem>>, %arg7: memref<8x256xf32, #tpu.memory_space<vmem>>) attributes {dimension_semantics = [#tpu.dimension_semantics<parallel>], iteration_bounds = array<i64: 2>, scalar_prefetch = 0 : i64, scratch_operands = 0 : i64, tpu.core_type = #tpu.core_type<tc>, window_params = [{transform_indices = @transform_0, window_bounds = array<i64: 100, 256>}, {transform_indices = @transform_1, window_bounds = array<i64: 4, 256>}, {pipeline_mode = #tpu.pipeline_mode<synchronous>, transform_indices = @transform_2, window_bounds = array<i64: 4, 100>}, {pipeline_mode = #tpu.pipeline_mode<synchronous>, transform_indices = @transform_3, window_bounds = array<i64: 4, 1>}, {pipeline_mode = #tpu.pipeline_mode<synchronous>, transform_indices = @transform_4, window_bounds = array<i64: 8, 4>}, {pipeline_mode = #tpu.pipeline_mode<synchronous>, transform_indices = @transform_5, window_bounds = array<i64: 8, 1>}, {transform_indices = @transform_6, window_bounds = array<i64: 8, 256>}]} {
    %c0 = arith.constant 0 : index
    %c0_0 = arith.constant 0 : index
    %0 = vector.load %arg3[%c0, %c0_0] : memref<4x100xf32, #tpu.memory_space<vmem>>, vector<4x100xf32>
    %c0_1 = arith.constant 0 : index
    %c0_2 = arith.constant 0 : index
    %1 = vector.load %arg1[%c0_1, %c0_2] : memref<100x256xf32, #tpu.memory_space<vmem>>, vector<100x256xf32>
    %cst = arith.constant dense<0.000000e+00> : vector<4x256xf32>
    %2 = tpu.matmul %0, %1, %cst {dimension_numbers = #tpu.dot_dimension_numbers<[1], [0], [0], [1], [0, 0, 1, 1], [], []>} : vector<4x100xf32>, vector<100x256xf32>, vector<4x256xf32> -> vector<4x256xf32>
    %c0_3 = arith.constant 0 : index
    %c0_4 = arith.constant 0 : index
    %3 = vector.load %arg4[%c0_3, %c0_4] : memref<4x1xf32, #tpu.memory_space<vmem>>, vector<4x1xf32>
    %4 = vector.broadcast %3 : vector<4x1xf32> to vector<4x256xf32>
    %5 = arith.addf %2, %4 : vector<4x256xf32>
    %c0_5 = arith.constant 0 : index
    %c0_6 = arith.constant 0 : index
    %6 = vector.load %arg2[%c0_5, %c0_6] : memref<4x256xf32, #tpu.memory_space<vmem>>, vector<4x256xf32>
    %cst_7 = arith.constant 0.000000e+00 : f32
    %7 = vector.broadcast %cst_7 : f32 to vector<4x256xf32>
    %8 = arith.maximumf %5, %7 : vector<4x256xf32>
    %9 = arith.addf %6, %8 : vector<4x256xf32>
    %c0_8 = arith.constant 0 : index
    %c0_9 = arith.constant 0 : index
    %10 = vector.load %arg5[%c0_8, %c0_9] : memref<8x4xf32, #tpu.memory_space<vmem>>, vector<8x4xf32>
    %cst_10 = arith.constant dense<0.000000e+00> : vector<8x256xf32>
    %11 = tpu.matmul %10, %9, %cst_10 {dimension_numbers = #tpu.dot_dimension_numbers<[1], [0], [0], [1], [0, 0, 1, 1], [], []>} : vector<8x4xf32>, vector<4x256xf32>, vector<8x256xf32> -> vector<8x256xf32>
    %c0_11 = arith.constant 0 : index
    %c0_12 = arith.constant 0 : index
    %12 = vector.load %arg6[%c0_11, %c0_12] : memref<8x1xf32, #tpu.memory_space<vmem>>, vector<8x1xf32>
    %13 = vector.broadcast %12 : vector<8x1xf32> to vector<8x256xf32>
    %14 = arith.addf %11, %13 : vector<8x256xf32>
    %c0_13 = arith.constant 0 : index
    %c0_14 = arith.constant 0 : index
    %15 = vector.load %arg7[%c0_13, %c0_14] : memref<8x256xf32, #tpu.memory_space<vmem>>, vector<8x256xf32>
    tpu.vector_store %arg7[%c0_13, %c0_14], %14 {strides = array<i32>} : memref<8x256xf32, #tpu.memory_space<vmem>>, vector<8x256xf32>,
    return
  }
  func.func @transform_0(%arg0: i32) -> (i32, i32) {
    %c0_i32 = arith.constant 0 : i32
    %c0_i32_0 = arith.constant 0 : i32
    return %c0_i32, %arg0 : i32, i32
  }
  func.func @transform_1(%arg0: i32) -> (i32, i32) {
    %c0_i32 = arith.constant 0 : i32
    %c0_i32_0 = arith.constant 0 : i32
    return %c0_i32, %arg0 : i32, i32
  }
  func.func @transform_2(%arg0: i32) -> (i32, i32) {
    %c0_i32 = arith.constant 0 : i32
    %c0_i32_0 = arith.constant 0 : i32
    %c0_i32_1 = arith.constant 0 : i32
    return %c0_i32, %c0_i32_0 : i32, i32
  }
  func.func @transform_3(%arg0: i32) -> (i32, i32) {
    %c0_i32 = arith.constant 0 : i32
    %c0_i32_0 = arith.constant 0 : i32
    %c0_i32_1 = arith.constant 0 : i32
    return %c0_i32, %c0_i32_0 : i32, i32
  }
  func.func @transform_4(%arg0: i32) -> (i32, i32) {
    %c0_i32 = arith.constant 0 : i32
    %c0_i32_0 = arith.constant 0 : i32
    %c0_i32_1 = arith.constant 0 : i32
    return %c0_i32, %c0_i32_0 : i32, i32
  }
  func.func @transform_5(%arg0: i32) -> (i32, i32) {
    %c0_i32 = arith.constant 0 : i32
    %c0_i32_0 = arith.constant 0 : i32
    %c0_i32_1 = arith.constant 0 : i32
    return %c0_i32, %c0_i32_0 : i32, i32
  }
  func.func @transform_6(%arg0: i32) -> (i32, i32) {
    %c0_i32 = arith.constant 0 : i32
    %c0_i32_0 = arith.constant 0 : i32
    return %c0_i32, %arg0 : i32, i32
  }
}

</mosaic_0001>

<llo_original>
// kernel: resblock_forward.1
$region0: #{resblock_forward.1}
  #allocation0 [shape = 'u32[]', space=smem, size = 0x4, offset = 0x4, fixed_abs, tag = 'smem constant byte address 0x4 - core index']
  #allocation1 [shape = 'u32[144,128]{1,0:T(1,128)}', space=vmem, size = 0x12000, scoped, tag = 'internal scratch']
  %s0 = inlined_call_operand.vmem [shape: f32[100,512], index: 0, kind: input, shape index: {}]
  %s1 = inlined_call_operand.vmem [shape: f32[4,512], index: 1, kind: input, shape index: {}]
  %s2 = inlined_call_operand.vmem [shape: f32[4,100], index: 2, kind: input, shape index: {}]
  %s3 = inlined_call_operand.vmem [shape: f32[4,1], index: 3, kind: input, shape index: {}]
  %s4 = inlined_call_operand.vmem [shape: f32[8,4], index: 4, kind: input, shape index: {}]
  %s5 = inlined_call_operand.vmem [shape: f32[8,1], index: 5, kind: input, shape index: {}]
  %s6 = inlined_call_operand.vmem [shape: f32[8,512], index: 6, kind: output, shape index: {}]
  %s7 = sld [smem:[#allocation0]]
  $region80: #{resblock_forward.1} parent=0
    _
  %s9 = ssub.s32 1, %s7
  %s10 = scalar_select 0, %s9, %s7
  $region1: #{resblock_forward.1} parent=0
    #allocation2 [shape = 'u8[212992]{0}', space=vmem, size = 0x34000, scoped, tag = 'input window, operand 0']
    loop: start=0, step=1, limit=4
    $region2: #{resblock_forward.1} parent=1 // loop_pre_header
      _
    $region3: #{resblock_forward.1} parent=1 // loop_header
      %s12 = sphi 0, %s16
      %p13 = scmp.ge.s32.totalorder %s12, 4
      %s22 = sphi 0, %s24
      %s25 = sphi 0, %s22
      %s26 = sphi 0, %s25
      %s42 = sphi 0, %s26
      %s48 = sphi 0, %s50
      %s51 = sphi 0, %s48
      %s52 = sphi 0, %s51
      %s68 = sphi 0, %s52
      %s72 = sphi 0, %s72
      %s74 = sphi 0, %s72
      %s75 = sphi 0, %s74
      %s89 = sphi 0, %s75
      %s93 = sphi 0, %s93
      %s95 = sphi 0, %s93
      %s96 = sphi 0, %s95
      %s110 = sphi 0, %s96
      %s114 = sphi 0, %s114
      %s116 = sphi 0, %s114
      %s117 = sphi 0, %s116
      %s131 = sphi 0, %s117
      %s135 = sphi 0, %s135
      %s137 = sphi 0, %s135
      %s138 = sphi 0, %s137
      %s152 = sphi 0, %s138
      %s158 = sphi 0, %s160
      %s161 = sphi 0, %s158
      %s162 = sphi 0, %s161
      %s178 = sphi 0, %s162
    $region4: #{resblock_forward.1} parent=1 // loop_header_branch
      %15 = sbr.rel (%p13) target = $region8
    $region5: #{resblock_forward.1} parent=1 // loop_body
      %s17 = ssub.s32 %s12, 1
      %s18 = ssub.s32 %s12, 2
      %s19 = sadd.s32 %s12, 1
      %s20 = ssub.s32 %s12, %s19
      %p21 = scmp.eq.s32.totalorder %s20, 0
      %s23 = sadd.s32 %s22, 1
      %s24 = scalar_select %p21, %s22, %s23
      %p27 = pneg %p21
      %p28 = scmp.eq.s32.totalorder %s12, 1
      %p29 = por %p27, %p28
      %p30 = scmp.ne.s32.totalorder %s22, %s25
      %p31 = scmp.eq.s32.totalorder %s12, 0
      %p32 = por %p30, %p31
      %p33 = scmp.ne.s32.totalorder %s22, %s25
      %p34 = scmp.eq.s32.totalorder %s17, 1
      %p35 = por %p33, %p34
      %p36 = scmp.ne.s32.totalorder %s25, %s26
      %p37 = scmp.eq.s32.totalorder %s17, 0
      %p38 = por %p36, %p37
      %p39 = scmp.ne.s32.totalorder %s25, %s26
      %p40 = scmp.eq.s32.totalorder %s18, 1
      %p41 = por %p39, %p40
      %p43 = scmp.ne.s32.totalorder %s26, %s42
      %p44 = scmp.eq.s32.totalorder %s18, 0
      %p45 = por %p43, %p44
      %s46 = ssub.s32 %s12, %s19
      %p47 = scmp.eq.s32.totalorder %s46, 0
      %s49 = sadd.s32 %s48, 1
      %s50 = scalar_select %p47, %s48, %s49
      %p53 = pneg %p47
      %p54 = scmp.eq.s32.totalorder %s12, 1
      %p55 = por %p53, %p54
      %p56 = scmp.ne.s32.totalorder %s48, %s51
      %p57 = scmp.eq.s32.totalorder %s12, 0
      %p58 = por %p56, %p57
      %p59 = scmp.ne.s32.totalorder %s48, %s51
      %p60 = scmp.eq.s32.totalorder %s17, 1
      %p61 = por %p59, %p60
      %p62 = scmp.ne.s32.totalorder %s51, %s52
      %p63 = scmp.eq.s32.totalorder %s17, 0
      %p64 = por %p62, %p63
      %p65 = scmp.ne.s32.totalorder %s51, %s52
      %p66 = scmp.eq.s32.totalorder %s18, 1
      %p67 = por %p65, %p66
      %p69 = scmp.ne.s32.totalorder %s52, %s68
      %p70 = scmp.eq.s32.totalorder %s18, 0
      %p71 = por %p69, %p70
      %s73 = sadd.s32 %s72, 1
      %p76 = scmp.eq.s32.totalorder %s12, 1
      %p77 = scmp.ne.s32.totalorder %s72, %s74
      %p78 = scmp.eq.s32.totalorder %s12, 0
      %p79 = por %p77, %p78
      %p80 = scmp.ne.s32.totalorder %s72, %s74
      %p81 = scmp.eq.s32.totalorder %s17, 1
      %p82 = por %p80, %p81
      %p83 = scmp.ne.s32.totalorder %s74, %s75
      %p84 = scmp.eq.s32.totalorder %s17, 0
      %p85 = por %p83, %p84
      %p86 = scmp.ne.s32.totalorder %s74, %s75
      %p87 = scmp.eq.s32.totalorder %s18, 1
      %p88 = por %p86, %p87
      %p90 = scmp.ne.s32.totalorder %s75, %s89
      %p91 = scmp.eq.s32.totalorder %s18, 0
      %p92 = por %p90, %p91
      %s94 = sadd.s32 %s93, 1
      %p97 = scmp.eq.s32.totalorder %s12, 1
      %p98 = scmp.ne.s32.totalorder %s93, %s95
      %p99 = scmp.eq.s32.totalorder %s12, 0
      %p100 = por %p98, %p99
      %p101 = scmp.ne.s32.totalorder %s93, %s95
      %p102 = scmp.eq.s32.totalorder %s17, 1
      %p103 = por %p101, %p102
      %p104 = scmp.ne.s32.totalorder %s95, %s96
      %p105 = scmp.eq.s32.totalorder %s17, 0
      %p106 = por %p104, %p105
      %p107 = scmp.ne.s32.totalorder %s95, %s96
      %p108 = scmp.eq.s32.totalorder %s18, 1
      %p109 = por %p107, %p108
      %p111 = scmp.ne.s32.totalorder %s96, %s110
      %p112 = scmp.eq.s32.totalorder %s18, 0
      %p113 = por %p111, %p112
      %s115 = sadd.s32 %s114, 1
      %p118 = scmp.eq.s32.totalorder %s12, 1
      %p119 = scmp.ne.s32.totalorder %s114, %s116
      %p120 = scmp.eq.s32.totalorder %s12, 0
      %p121 = por %p119, %p120
      %p122 = scmp.ne.s32.totalorder %s114, %s116
      %p123 = scmp.eq.s32.totalorder %s17, 1
      %p124 = por %p122, %p123
      %p125 = scmp.ne.s32.totalorder %s116, %s117
      %p126 = scmp.eq.s32.totalorder %s17, 0
      %p127 = por %p125, %p126
      %p128 = scmp.ne.s32.totalorder %s116, %s117
      %p129 = scmp.eq.s32.totalorder %s18, 1
      %p130 = por %p128, %p129
      %p132 = scmp.ne.s32.totalorder %s117, %s131
      %p133 = scmp.eq.s32.totalorder %s18, 0
      %p134 = por %p132, %p133
      %s136 = sadd.s32 %s135, 1
      %p139 = scmp.eq.s32.totalorder %s12, 1
      %p140 = scmp.ne.s32.totalorder %s135, %s137
      %p141 = scmp.eq.s32.totalorder %s12, 0
      %p142 = por %p140, %p141
      %p143 = scmp.ne.s32.totalorder %s135, %s137
      %p144 = scmp.eq.s32.totalorder %s17, 1
      %p145 = por %p143, %p144
      %p146 = scmp.ne.s32.totalorder %s137, %s138
      %p147 = scmp.eq.s32.totalorder %s17, 0
      %p148 = por %p146, %p147
      %p149 = scmp.ne.s32.totalorder %s137, %s138
      %p150 = scmp.eq.s32.totalorder %s18, 1
      %p151 = por %p149, %p150
      %p153 = scmp.ne.s32.totalorder %s138, %s152
      %p154 = scmp.eq.s32.totalorder %s18, 0
      %p155 = por %p153, %p154
      %s156 = ssub.s32 %s12, %s19
      %p157 = scmp.eq.s32.totalorder %s156, 0
      %s159 = sadd.s32 %s158, 1
      %s160 = scalar_select %p157, %s158, %s159
      %p163 = pneg %p157
      %p164 = scmp.eq.s32.totalorder %s12, 1
      %p165 = por %p163, %p164
      %p166 = scmp.ne.s32.totalorder %s158, %s161
      %p167 = scmp.eq.s32.totalorder %s12, 0
      %p168 = por %p166, %p167
      %p169 = scmp.ne.s32.totalorder %s158, %s161
      %p170 = scmp.eq.s32.totalorder %s17, 1
      %p171 = por %p169, %p170
      %p172 = scmp.ne.s32.totalorder %s161, %s162
      %p173 = scmp.eq.s32.totalorder %s17, 0
      %p174 = por %p172, %p173
      %p175 = scmp.ne.s32.totalorder %s161, %s162
      %p176 = scmp.eq.s32.totalorder %s18, 1
      %p177 = por %p175, %p176
      %p179 = scmp.ne.s32.totalorder %s162, %s178
      %p180 = scmp.eq.s32.totalorder %s18, 0
      %p181 = por %p179, %p180
      %p182 = scmp.le.s32.totalorder 1, %s12
      %p183 = scmp.lt.s32.totalorder %s12, 3
      %p184 = pnand %p182, %p183
      %p185 = pneg %p184
      // Predicated region
      $region9: #{resblock_forward.1} parent=5 // pred_check
        _
      $region10: #{resblock_forward.1} parent=5 // pred_check_branch
        %187 = sbr.rel (%p184) target = $region12
      $region11: #{resblock_forward.1} parent=5 // pred_region
        %s188 = ssub.s32 %s12, 1
        // Predicated region
        $region13: #{resblock_forward.1} parent=11 // pred_check
          %p189 = pneg %p85
        $region14: #{resblock_forward.1} parent=11 // pred_check_branch
          %191 = sbr.rel (%p189) target = $region16
        $region15: #{resblock_forward.1} parent=11 // pred_region
          _
        $region16: #{resblock_forward.1} parent=11 // pred_fallthru
          _
        // Predicated region
        $region17: #{resblock_forward.1} parent=11 // pred_check
          %p192 = pneg %p106
        $region18: #{resblock_forward.1} parent=11 // pred_check_branch
          %194 = sbr.rel (%p192) target = $region20
        $region19: #{resblock_forward.1} parent=11 // pred_region
          _
        $region20: #{resblock_forward.1} parent=11 // pred_fallthru
          _
        // Predicated region
        $region21: #{resblock_forward.1} parent=11 // pred_check
          %p195 = pneg %p127
        $region22: #{resblock_forward.1} parent=11 // pred_check_branch
          %197 = sbr.rel (%p195) target = $region24
        $region23: #{resblock_forward.1} parent=11 // pred_region
          _
        $region24: #{resblock_forward.1} parent=11 // pred_fallthru
          _
        // Predicated region
        $region25: #{resblock_forward.1} parent=11 // pred_check
          %p198 = pneg %p148
        $region26: #{resblock_forward.1} parent=11 // pred_check_branch
          %200 = sbr.rel (%p198) target = $region28
        $region27: #{resblock_forward.1} parent=11 // pred_region
          _
        $region28: #{resblock_forward.1} parent=11 // pred_fallthru
          _
      $region12: #{resblock_forward.1} parent=5 // pred_fallthru
        _
      %p201 = scmp.lt.s32.totalorder %s12, 2
      // Predicated region
      $region29: #{resblock_forward.1} parent=5 // pred_check
        %p202 = pneg %p201
      $region30: #{resblock_forward.1} parent=5 // pred_check_branch
        %204 = sbr.rel (%p202) target = $region32
      $region31: #{resblock_forward.1} parent=5 // pred_region
        // Predicated region
        $region33: #{resblock_forward.1} parent=31 // pred_check
          %p205 = pneg %p32
        $region34: #{resblock_forward.1} parent=31 // pred_check_branch
          %207 = sbr.rel (%p205) target = $region36
        $region35: #{resblock_forward.1} parent=31 // pred_region
          %s208 = sand.u32 %s22, 1
          %s209 = sand.u32 %s22, 1
          %s210 = smul.addr %s209, 208
          %s211 = scalar_lea.vmem [#allocation2], %s210
          %s212 = smul.u32 2, %s12
          %s213 = smul.addr %s212, 8
          %s214 = scalar_lea.vmem %s0, %s213
          // Predicated region
          $region37: #{resblock_forward.1} parent=35 // pred_check
            _
          $region38: #{resblock_forward.1} parent=35 // pred_check_branch
            %216 = sbr.rel (0) target = $region40
          $region39: #{resblock_forward.1} parent=35 // pred_region
            // Predicated region
            $region41: #{resblock_forward.1} parent=39 // pred_check
              _
            $region42: #{resblock_forward.1} parent=39 // pred_check_branch
              %218 = sbr.rel (0) target = $region44
            $region43: #{resblock_forward.1} parent=39 // pred_region
              loop: start=0, step=1, limit=1
              $region45: #{resblock_forward.1} parent=43 // loop_pre_header
                _
              $region46: #{resblock_forward.1} parent=43 // loop_header
                %s220 = sphi 0, %s224
                %p221 = scmp.ge.s32.totalorder %s220, 1
                %s225 = sphi %s214, %s214
                %s226 = sphi %s211, %s211
              $region47: #{resblock_forward.1} parent=43 // loop_header_branch
                %223 = sbr.rel (%p221) target = $region51
              $region48: #{resblock_forward.1} parent=43 // loop_body
                %v227 = vld [vmem:[%s225] sm:$0xff]
                %228 = vst [vmem:[%s226] sm:$0xff] %v227
                %v229 = vld [vmem:[%s225 + $0x8] sm:$0xff]
                %230 = vst [vmem:[%s226 + $0x8] sm:$0xff] %v229
                %v231 = vld [vmem:[%s225 + $0x20] sm:$0xff]
                %232 = vst [vmem:[%s226 + $0x10] sm:$0xff] %v231
                %v233 = vld [vmem:[%s225 + $0x28] sm:$0xff]
                %234 = vst [vmem:[%s226 + $0x18] sm:$0xff] %v233
                %v235 = vld [vmem:[%s225 + $0x40] sm:$0xff]
                %236 = vst [vmem:[%s226 + $0x20] sm:$0xff] %v235
                %v237 = vld [vmem:[%s225 + $0x48] sm:$0xff]
                %238 = vst [vmem:[%s226 + $0x28] sm:$0xff] %v237
                %v239 = vld [vmem:[%s225 + $0x60] sm:$0xff]
                %240 = vst [vmem:[%s226 + $0x30] sm:$0xff] %v239
                %v241 = vld [vmem:[%s225 + $0x68] sm:$0xff]
                %242 = vst [vmem:[%s226 + $0x38] sm:$0xff] %v241
                %v243 = vld [vmem:[%s225 + $0x80] sm:$0xff]
                %244 = vst [vmem:[%s226 + $0x40] sm:$0xff] %v243
                %v245 = vld [vmem:[%s225 + $0x88] sm:$0xff]
                %246 = vst [vmem:[%s226 + $0x48] sm:$0xff] %v245
                %v247 = vld [vmem:[%s225 + $0xa0] sm:$0xff]
                %248 = vst [vmem:[%s226 + $0x50] sm:$0xff] %v247
                %v249 = vld [vmem:[%s225 + $0xa8] sm:$0xff]
                %250 = vst [vmem:[%s226 + $0x58] sm:$0xff] %v249
                %v251 = vld [vmem:[%s225 + $0xc0] sm:$0xff]
                %252 = vst [vmem:[%s226 + $0x60] sm:$0xff] %v251
                %v253 = vld [vmem:[%s225 + $0xc8] sm:$0xff]
                %254 = vst [vmem:[%s226 + $0x68] sm:$0xff] %v253
                %v255 = vld [vmem:[%s225 + $0xe0] sm:$0xff]
                %256 = vst [vmem:[%s226 + $0x70] sm:$0xff] %v255
                %v257 = vld [vmem:[%s225 + $0xe8] sm:$0xff]
                %258 = vst [vmem:[%s226 + $0x78] sm:$0xff] %v257
                %v259 = vld [vmem:[%s225 + $0x100] sm:$0xff]
                %260 = vst [vmem:[%s226 + $0x80] sm:$0xff] %v259
                %v261 = vld [vmem:[%s225 + $0x108] sm:$0xff]
                %262 = vst [vmem:[%s226 + $0x88] sm:$0xff] %v261
                %v263 = vld [vmem:[%s225 + $0x120] sm:$0xff]
                %264 = vst [vmem:[%s226 + $0x90] sm:$0xff] %v263
                %v265 = vld [vmem:[%s225 + $0x128] sm:$0xff]
                %266 = vst [vmem:[%s226 + $0x98] sm:$0xff] %v265
                %v267 = vld [vmem:[%s225 + $0x140] sm:$0xff]
                %268 = vst [vmem:[%s226 + $0xa0] sm:$0xff] %v267
                %v269 = vld [vmem:[%s225 + $0x148] sm:$0xff]
                %270 = vst [vmem:[%s226 + $0xa8] sm:$0xff] %v269
                %v271 = vld [vmem:[%s225 + $0x160] sm:$0xff]
                %272 = vst [vmem:[%s226 + $0xb0] sm:$0xff] %v271
                %v273 = vld [vmem:[%s225 + $0x168] sm:$0xff]
                %274 = vst [vmem:[%s226 + $0xb8] sm:$0xff] %v273
                %v275 = vld [vmem:[%s225 + $0x180] sm:$0xff]
                %276 = vst [vmem:[%s226 + $0xc0] sm:$0xff] %v275
                %v277 = vld [vmem:[%s225 + $0x188] sm:$0xff]
                %278 = vst [vmem:[%s226 + $0xc8] sm:$0xff] %v277
              $region49: #{resblock_forward.1} parent=43 // loop_footer
                %s224 = sadd.s32 1, %s220
              $region50: #{resblock_forward.1} parent=43 // loop_footer_branch
                %219 = sbr.rel target = $region46
              $region51: #{resblock_forward.1} parent=43 // loop_exit
                _
            $region44: #{resblock_forward.1} parent=39 // pred_fallthru
              _
            // Predicated region
            $region52: #{resblock_forward.1} parent=39 // pred_check
              _
            $region53: #{resblock_forward.1} parent=39 // pred_check_branch
              %280 = sbr.rel target = $region55
            $region54: #{resblock_forward.1} parent=39 // pred_region
              _
            $region55: #{resblock_forward.1} parent=39 // pred_fallthru
              _
          $region40: #{resblock_forward.1} parent=35 // pred_fallthru
            _
          %281 = vnop
        $region36: #{resblock_forward.1} parent=31 // pred_fallthru
          _
        // Predicated region
        $region56: #{resblock_forward.1} parent=31 // pred_check
          %p282 = pneg %p58
        $region57: #{resblock_forward.1} parent=31 // pred_check_branch
          %284 = sbr.rel (%p282) target = $region59
        $region58: #{resblock_forward.1} parent=31 // pred_region
          %s285 = smul.u32 2, %s12
          %p286 = scmp.lt.s32.totalorder %s285, 3
          %s287 = scalar_select %p286, %s285, 3
          %s288 = smul.addr %s287, 4
          %s289 = scalar_lea.vmem %s1, %s288
          %s290 = smul.u32 2, %s12
        $region59: #{resblock_forward.1} parent=31 // pred_fallthru
          _
      $region32: #{resblock_forward.1} parent=5 // pred_fallthru
        _
      %p291 = scmp.le.s32.totalorder 1, %s12
      %p292 = scmp.lt.s32.totalorder %s12, 3
      %p293 = pnand %p291, %p292
      %p294 = pneg %p293
      // Predicated region
      $region60: #{resblock_forward.1} parent=5 // pred_check
        _
      $region61: #{resblock_forward.1} parent=5 // pred_check_branch
        %296 = sbr.rel (%p293) target = $region63
      $region62: #{resblock_forward.1} parent=5 // pred_region
        %s297 = ssub.s32 %s12, 1
        %s298 = sand.u32 %s25, 1
        %s299 = sand.u32 %s25, 1
        %s300 = smul.addr %s299, 208
        %s301 = scalar_lea.vmem [#allocation2], %s300
        // Predicated region
        $region64: #{resblock_forward.1} parent=62 // pred_check
          %p302 = pneg %p38
        $region65: #{resblock_forward.1} parent=62 // pred_check_branch
          %304 = sbr.rel (%p302) target = $region67
        $region66: #{resblock_forward.1} parent=62 // pred_region
          _
        $region67: #{resblock_forward.1} parent=62 // pred_fallthru
          _
        %s305 = sand.u32 %s25, 1
        %s306 = sand.u32 %s25, 1
        %s307 = smul.addr %s306, 208
        %s308 = scalar_lea.vmem [#allocation2], %s307
        %p309 = pneg %p38
        %p310 = pneg %p35
        %s311 = smul.u32 2, %s17
        %p312 = scmp.lt.s32.totalorder %s311, 3
        %s313 = scalar_select %p312, %s311, 3
        %s314 = smul.addr %s313, 4
        %s315 = scalar_lea.vmem %s1, %s314
        %p316 = pneg %p64
        %p317 = pneg %p61
        %p318 = pneg %p85
        %p319 = pneg %p82
        %p320 = pneg %p106
        %p321 = pneg %p103
        %p322 = pneg %p127
        %p323 = pneg %p124
        %p324 = pneg %p148
        %p325 = pneg %p145
        %p326 = pneg %p174
        %p327 = pneg %p171
        %s328 = smul.u32 2, %s17
        %p329 = scmp.lt.s32.totalorder %s328, 3
        %s330 = scalar_select %p329, %s328, 3
        %s331 = smul.addr %s330, 8
        %s332 = scalar_lea.vmem %s6, %s331
        %s333 = smul.u32 2, %s17
        %s334 = smul.u32 2, %s17
        %p335 = scmp.lt.s32.totalorder %s334, 3
        %s336 = scalar_select %p335, %s334, 3
        %s337 = smul.addr %s336, 4
        %s338 = scalar_lea.vmem %s1, %s337
        %s339 = smul.u32 2, %s17
        %s340 = smul.u32 2, %s17
        %p341 = scmp.lt.s32.totalorder %s340, 3
        %s342 = scalar_select %p341, %s340, 3
        %s343 = smul.addr %s342, 8
        %s344 = scalar_lea.vmem %s6, %s343
        %s345 = smul.u32 2, %s17
        %v346 = vld [vmem:[%s2] sm:$0xf]
        %v347 = vld [vmem:[%s301] sm:$0xff]
        %v348 = vld [vmem:[%s301 + $0x8] sm:$0xff]
        %v349 = vld [vmem:[%s301 + $0x10] sm:$0xff]
        %v350 = vld [vmem:[%s301 + $0x18] sm:$0xff]
        %v351 = vld [vmem:[%s301 + $0x20] sm:$0xff]
        %v352 = vld [vmem:[%s301 + $0x28] sm:$0xff]
        %v353 = vld [vmem:[%s301 + $0x30] sm:$0xff]
        %v354 = vld [vmem:[%s301 + $0x38] sm:$0xff]
        %v355 = vld [vmem:[%s301 + $0x40] sm:$0xff]
        %v356 = vld [vmem:[%s301 + $0x48] sm:$0xff]
        %v357 = vld [vmem:[%s301 + $0x50] sm:$0xff]
        %v358 = vld [vmem:[%s301 + $0x58] sm:$0xff]
        %v359 = vld [vmem:[%s301 + $0x60] sm:$0xff]
        %v360 = vld [vmem:[%s301 + $0x68] sm:$0xff]
        %v361 = vld [vmem:[%s301 + $0x70] sm:$0xff]
        %v362 = vld [vmem:[%s301 + $0x78] sm:$0xff]
        %v363 = vld [vmem:[%s301 + $0x80] sm:$0xff]
        %v364 = vld [vmem:[%s301 + $0x88] sm:$0xff]
        %v365 = vld [vmem:[%s301 + $0x90] sm:$0xff]
        %v366 = vld [vmem:[%s301 + $0x98] sm:$0xff]
        %v367 = vld [vmem:[%s301 + $0xa0] sm:$0xff]
        %v368 = vld [vmem:[%s301 + $0xa8] sm:$0xff]
        %v369 = vld [vmem:[%s301 + $0xb0] sm:$0xff]
        %v370 = vld [vmem:[%s301 + $0xb8] sm:$0xff]
        %v371 = vld [vmem:[%s301 + $0xc0] sm:$0xf]
        %v372 = vld [vmem:[%s301 + $0xc8] sm:$0xf]
        %v373 = vld [vmem:[%s3] sm:$0xf]
        %375 = vset.pattern.permute.xlu0 0
        %376 = vperm.xlu0 %375, %v373
        %v377 = vpop.permute.xlu0 %376
        %vm379 = vcmask 818176
        %v381 = vsel %vm379, %v346, 0
        %vm383 = vcmask 1043456
        %v385 = vsel %vm383, %v371, 0
        %v388 = vsel %vm383, %v372, 0
        %390 = vmatprep.subr.mxu0 %v348
        %391 = vmatpush1.msra.mxu0 %v347
        %392 = vmatprep.subr.mxu0 %v350
        %393 = vmatpush1.msra.mxu0 %v349
        %394 = vmatprep.subr.mxu0 %v352
        %395 = vmatpush1.msra.mxu0 %v351
        %396 = vmatprep.subr.mxu0 %v354
        %397 = vmatpush1.msra.mxu0 %v353
        %398 = vmatprep.subr.mxu0 %v356
        %399 = vmatpush1.msra.mxu0 %v355
        %400 = vmatprep.subr.mxu0 %v358
        %401 = vmatpush1.msra.mxu0 %v357
        %402 = vmatprep.subr.mxu0 %v360
        %403 = vmatpush1.msra.mxu0 %v359
        %404 = vmatprep.subr.mxu0 %v362
        %405 = vmatpush1.msra.mxu0 %v361
        %406 = vmatprep.subr.mxu0 %v364
        %407 = vmatpush1.msra.mxu0 %v363
        %408 = vmatprep.subr.mxu0 %v366
        %409 = vmatpush1.msra.mxu0 %v365
        %410 = vmatprep.subr.mxu0 %v368
        %411 = vmatpush1.msra.mxu0 %v367
        %412 = vmatprep.subr.mxu0 %v370
        %413 = vmatpush1.msra.mxu0 %v369
        %414 = vmatprep.subr.mxu0 %v388
        %415 = vmatpush1.msra.mxu0 %v385
        %416 = vmatprep.subr.mxu0 0.0
        %417 = vmatpush1.msra.mxu0 0.0
        %418 = vmatprep.subr.mxu0 0.0
        %419 = vmatpush1.msra.mxu0 0.0
        %420 = vmatprep.subr.mxu0 0.0
        %421 = vmatpush1.msra.mxu0 0.0
        %422 = vmatprep.subr.mxu0 0.0
        %423 = vmatpush1.msra.mxu0 0.0
        %424 = vmatprep.subr.mxu0 0.0
        %425 = vmatpush1.msra.mxu0 0.0
        %426 = vmatprep.subr.mxu0 0.0
        %427 = vmatpush1.msra.mxu0 0.0
        %428 = vmatprep.subr.mxu0 0.0
        %429 = vmatpush1.msra.mxu0 0.0
        %430 = vmatprep.subr.mxu0 0.0
        %431 = vmatpush1.msra.mxu0 0.0
        %432 = vmatprep.subr.mxu0 0.0
        %433 = vmatpush1.msra.mxu0 0.0
        %434 = vmatprep.subr.mxu0 0.0
        %435 = vmatpush1.msra.mxu0 0.0
        %436 = vmatprep.subr.mxu0 0.0
        %437 = vmatpush1.msra.mxu0 0.0
        %438 = vmatprep.subr.mxu0 0.0
        %439 = vmatpush1.msra.mxu0 0.0
        %440 = vmatprep.subr.mxu0 0.0
        %441 = vmatpush1.msra.mxu0 0.0
        %442 = vmatprep.subr.mxu0 0.0
        %443 = vmatpush1.msra.mxu0 0.0
        %444 = vmatprep.subr.mxu0 0.0
        %445 = vmatpush1.msra.mxu0 0.0
        %446 = vmatprep.subr.mxu0 0.0
        %447 = vmatpush1.msra.mxu0 0.0
        %448 = vmatprep.subr.mxu0 0.0
        %449 = vmatpush1.msra.mxu0 0.0
        %450 = vmatprep.subr.mxu0 0.0
        %451 = vmatpush1.msra.mxu0 0.0
        %452 = vmatprep.subr.mxu0 0.0
        %453 = vmatpush1.msra.mxu0 0.0
        %454 = vmatprep.mubr.f32.mxu0 0.0
        %455 = vmatmul.mubr.f32.gmra.mrb[0].mxu0 %v381
        %v456 = vpop.f32.mrb[0].mxu0
        %v457 = vadd.f32 %v377, %v456
        %v458 = vpop.f32.mrb[0].mxu0
        %v459 = vadd.f32 %v377, %v458
        %460 = vdwg.mxu0
        %v461 = vld [vmem:[%s338] sm:$0xff]
        %v462 = vmax.f32 %v457, 0.0
        %v463 = vmax.f32 %v459, 0.0
        %v466 = vcombine.low %v462, %v463
        %v468 = vadd.f32 %v461, %v466
        %v469 = vld [vmem:[%s4] sm:$0xff]
        %v470 = vld [vmem:[%s5] sm:$0xff]
        %472 = vset.pattern.permute.xlu0 0
        %473 = vperm.xlu0 %472, %v470
        %v474 = vpop.permute.xlu0 %473
        %v477 = vcombine.high %v468, %v468
        %vm478 = vcmask 31744
        %v480 = vsel %vm478, %v469, 0
        %v482 = vsel %vm383, %v468, 0
        %v484 = vsel %vm383, %v477, 0
        %486 = vmatprep.subr.mxu0 %v484
        %487 = vmatpush1.msra.mxu0 %v482
        %488 = vmatprep.subr.mxu0 0.0
        %489 = vmatpush1.msra.mxu0 0.0
        %490 = vmatprep.subr.mxu0 0.0
        %491 = vmatpush1.msra.mxu0 0.0
        %492 = vmatprep.subr.mxu0 0.0
        %493 = vmatpush1.msra.mxu0 0.0
        %494 = vmatprep.subr.mxu0 0.0
        %495 = vmatpush1.msra.mxu0 0.0
        %496 = vmatprep.subr.mxu0 0.0
        %497 = vmatpush1.msra.mxu0 0.0
        %498 = vmatprep.subr.mxu0 0.0
        %499 = vmatpush1.msra.mxu0 0.0
        %500 = vmatprep.subr.mxu0 0.0
        %501 = vmatpush1.msra.mxu0 0.0
        %502 = vmatprep.subr.mxu0 0.0
        %503 = vmatpush1.msra.mxu0 0.0
        %504 = vmatprep.subr.mxu0 0.0
        %505 = vmatpush1.msra.mxu0 0.0
        %506 = vmatprep.subr.mxu0 0.0
        %507 = vmatpush1.msra.mxu0 0.0
        %508 = vmatprep.subr.mxu0 0.0
        %509 = vmatpush1.msra.mxu0 0.0
        %510 = vmatprep.subr.mxu0 0.0
        %511 = vmatpush1.msra.mxu0 0.0
        %512 = vmatprep.subr.mxu0 0.0
        %513 = vmatpush1.msra.mxu0 0.0
        %514 = vmatprep.subr.mxu0 0.0
        %515 = vmatpush1.msra.mxu0 0.0
        %516 = vmatprep.subr.mxu0 0.0
        %517 = vmatpush1.msra.mxu0 0.0
        %518 = vmatprep.subr.mxu0 0.0
        %519 = vmatpush1.msra.mxu0 0.0
        %520 = vmatprep.subr.mxu0 0.0
        %521 = vmatpush1.msra.mxu0 0.0
        %522 = vmatprep.subr.mxu0 0.0
        %523 = vmatpush1.msra.mxu0 0.0
        %524 = vmatprep.subr.mxu0 0.0
        %525 = vmatpush1.msra.mxu0 0.0
        %526 = vmatprep.subr.mxu0 0.0
        %527 = vmatpush1.msra.mxu0 0.0
        %528 = vmatprep.subr.mxu0 0.0
        %529 = vmatpush1.msra.mxu0 0.0
        %530 = vmatprep.subr.mxu0 0.0
        %531 = vmatpush1.msra.mxu0 0.0
        %532 = vmatprep.subr.mxu0 0.0
        %533 = vmatpush1.msra.mxu0 0.0
        %534 = vmatprep.subr.mxu0 0.0
        %535 = vmatpush1.msra.mxu0 0.0
        %536 = vmatprep.subr.mxu0 0.0
        %537 = vmatpush1.msra.mxu0 0.0
        %538 = vmatprep.subr.mxu0 0.0
        %539 = vmatpush1.msra.mxu0 0.0
        %540 = vmatprep.subr.mxu0 0.0
        %541 = vmatpush1.msra.mxu0 0.0
        %542 = vmatprep.subr.mxu0 0.0
        %543 = vmatpush1.msra.mxu0 0.0
        %544 = vmatprep.subr.mxu0 0.0
        %545 = vmatpush1.msra.mxu0 0.0
        %546 = vmatprep.subr.mxu0 0.0
        %547 = vmatpush1.msra.mxu0 0.0
        %548 = vmatprep.subr.mxu0 0.0
        %549 = vmatpush1.msra.mxu0 0.0
        %550 = vmatprep.mubr.f32.mxu0 0.0
        %551 = vmatmul.mubr.f32.gmra.mrb[0].mxu0 %v480
        %v552 = vpop.f32.mrb[0].mxu0
        %v553 = vadd.f32 %v474, %v552
        %v554 = vpop.f32.mrb[0].mxu0
        %v555 = vadd.f32 %v474, %v554
        %556 = vdwg.mxu0
        %557 = vst [vmem:[%s344] sm:$0xff] %v553
        %558 = vst [vmem:[%s344 + $0x8] sm:$0xff] %v555
        %s559 = smul.u32 2, %s17
        %p560 = scmp.lt.s32.totalorder %s559, 3
        %s561 = scalar_select %p560, %s559, 3
        %s562 = smul.addr %s561, 8
        %s563 = scalar_lea.vmem %s6, %s562
        // Predicated region
        $region68: #{resblock_forward.1} parent=62 // pred_check
          %p564 = pneg %p171
        $region69: #{resblock_forward.1} parent=62 // pred_check_branch
          %566 = sbr.rel (%p564) target = $region71
        $region70: #{resblock_forward.1} parent=62 // pred_region
          %s567 = smul.u32 2, %s17
        $region71: #{resblock_forward.1} parent=62 // pred_fallthru
          _
      $region63: #{resblock_forward.1} parent=5 // pred_fallthru
        _
      %p568 = scmp.le.s32.totalorder 2, %s12
      // Predicated region
      $region72: #{resblock_forward.1} parent=5 // pred_check
        %p569 = pneg %p568
      $region73: #{resblock_forward.1} parent=5 // pred_check_branch
        %571 = sbr.rel (%p569) target = $region75
      $region74: #{resblock_forward.1} parent=5 // pred_region
        %s572 = ssub.s32 %s12, 2
        // Predicated region
        $region76: #{resblock_forward.1} parent=74 // pred_check
          %p573 = pneg %p177
        $region77: #{resblock_forward.1} parent=74 // pred_check_branch
          %575 = sbr.rel (%p573) target = $region79
        $region78: #{resblock_forward.1} parent=74 // pred_region
          %s576 = smul.u32 2, %s18
          %p577 = scmp.lt.s32.totalorder %s576, 3
          %s578 = scalar_select %p577, %s576, 3
          %s579 = smul.addr %s578, 8
          %s580 = scalar_lea.vmem %s6, %s579
        $region79: #{resblock_forward.1} parent=74 // pred_fallthru
          _
      $region75: #{resblock_forward.1} parent=5 // pred_fallthru
        _
    $region6: #{resblock_forward.1} parent=1 // loop_footer
      %s16 = sadd.s32 1, %s12
    $region7: #{resblock_forward.1} parent=1 // loop_footer_branch
      %11 = sbr.rel target = $region3
    $region8: #{resblock_forward.1} parent=1 // loop_exit
      _

</llo_original>
